<compile_context>
chip_gen: v7x
topology: tpu7x:2x2x1
jax: 0.10.0
libtpu: 0.0.40
codegen_flags: <defaults>
</compile_context>

<pallas_src>
import functools

import jax
import jax.numpy as jnp
from jax.experimental import pallas as pl
from jax.experimental.pallas import tpu as pltpu


def _round_up(v, m):
    return ((v + m - 1) // m) * m


_UNROLL_MAX = 8  # loops with at most this many tiles stay unrolled; longer ones roll


def _tiled_loop(n_tiles, body):
    """Run body(t) for t in [0, n_tiles): unrolled when short, lax.fori_loop when long."""
    if n_tiles <= 0:
        return
    if n_tiles <= _UNROLL_MAX:
        for t in range(n_tiles):
            body(t)
    else:
        def fori_body(t, carry):
            body(t)
            return carry

        jax.lax.fori_loop(0, n_tiles, fori_body, 0)


def _aligned(idx, align=8):
    """pl.multiple_of hint for traced indices; static python ints pass through."""
    if isinstance(idx, int):
        return idx
    return pl.multiple_of(idx, align)


# ----------------------------------------------------------------------------
# Fused EncoderBlock kernel (one grid step == one batch element)
# ----------------------------------------------------------------------------
def _encoder_block_kernel(xe_ref, xo_ref, w1_ref, t1_ref, w2_ref, t2_ref,
                          o_ref, he_scr, ho_scr, *, taps1, NE, NO, Lo, TQ, TP):
    """Conv1d(k3,p1)+BN+ReLU -> Conv1d(k3,p1)+BN+ReLU -> MaxPool1d(2,2), fused.

    The length axis is de-interleaved into even/odd banks so every access below is a
    dense, lane-dense block (no strided loads/stores, no sublane reshapes).

      xe_ref/xo_ref : even/odd input banks (im2col rows when taps1 == 1), bf16
      w1_ref        : (taps1, K1p, Coutp) bf16 conv1 weights (BN scale folded in)
      w2_ref        : (3, Coutp, Coutp)   bf16 conv2 weights (BN scale folded in)
      t1_ref/t2_ref : (1, Coutp) f32 folded conv-bias + BatchNorm(eval) shift
      o_ref         : (1, Lo, Coutp) bf16 pooled output (NLC)
      he_scr/ho_scr : even/odd banks of the conv1 output (bf16) with zero halo rows
    """
    cout = o_ref.shape[-1]
    OB = 8  # odd-bank offset: h[2m+1] lives at row OB+m, the h[-1] zero halo at row OB-1

    t1 = t1_ref[...]
    t2 = t2_ref[...]
    # Hoisted tile-shaped broadcasts (broadcast_in_dim is not CSE'd across unrolled
    # iterations; for rolled loops they become loop-invariant).
    t1_b = jnp.broadcast_to(t1, (TQ, cout))
    t2_b = jnp.broadcast_to(t2, (TP, cout))

    # --- zero halo rows with 8-row aligned stores only --------------------------------
    # Ordering invariant (kept explicit): these stores precede every conv1 store; windows
    # that also cover real h rows are rewritten by conv1 below.
    zeros8 = jnp.zeros((8, cout), jnp.bfloat16)
    ho_scr[0:OB, :] = zeros8                  # h[-1]  (odd bank row OB-1) = 0
    tail_e = (Lo // 8) * 8                    # aligned window covering row Lo: h[2*Lo] = 0
    he_scr[tail_e:tail_e + 8, :] = zeros8

    # --- conv1 (+folded bias/BN, ReLU) into the even/odd banks -------------------------
    def conv1_rows(even_bank, q0, rows, shift):
        if taps1 == 1:                 # im2col: a single MXU pass per tile
            xr = xe_ref if even_bank else xo_ref
            acc = jnp.dot(xr[0, pl.ds(q0, rows), :], w1_ref[0],
                          preferred_element_type=jnp.float32)
        else:                          # generic 3-tap shift-accumulate across x banks
            if even_bank:              # h[2q]   = x[2q-1]*W0 + x[2q]*W1   + x[2q+1]*W2
                taps = ((xo_ref, q0), (xe_ref, q0), (xo_ref, q0 + 1))
            else:                      # h[2q+1] = x[2q]*W0   + x[2q+1]*W1 + x[2q+2]*W2
                taps = ((xe_ref, q0), (xo_ref, q0 + 1), (xe_ref, q0 + 1))
            acc = jnp.zeros((rows, cout), jnp.float32)
            for k, (xr, r) in enumerate(taps):
                acc += jnp.dot(xr[0, pl.ds(r, rows), :], w1_ref[k],
                               preferred_element_type=jnp.float32)
        return jnp.maximum(acc + shift, 0.0).astype(jnp.bfloat16)

    ne_full, ne_rem = NE // TQ, NE % TQ

    def even_tile(t):
        q0 = _aligned(t * TQ)
        he_scr[pl.ds(q0, TQ), :] = conv1_rows(True, q0, TQ, t1_b)

    _tiled_loop(ne_full, even_tile)
    if ne_rem:
        q0 = ne_full * TQ
        he_scr[pl.ds(q0, ne_rem), :] = conv1_rows(True, q0, ne_rem, t1)

    no_full, no_rem = NO // TQ, NO % TQ

    def odd_tile(t):
        q0 = _aligned(t * TQ)
        ho_scr[pl.ds(OB + q0, TQ), :] = conv1_rows(False, q0, TQ, t1_b)

    _tiled_loop(no_full, odd_tile)
    if no_rem:
        q0 = no_full * TQ
        ho_scr[pl.ds(OB + q0, no_rem), :] = conv1_rows(False, q0, no_rem, t1)

    # --- conv2 (+folded bias/BN, ReLU) + MaxPool1d(2,2) entirely in registers ----------
    def conv2_pool(p0, rows, shift):
        e0 = he_scr[pl.ds(p0, rows), :]            # h[2p]
        e1 = he_scr[pl.ds(p0 + 1, rows), :]        # h[2p+2]
        om = ho_scr[pl.ds(OB - 1 + p0, rows), :]   # h[2p-1]
        o0 = ho_scr[pl.ds(OB + p0, rows), :]       # h[2p+1]
        acc_e = (jnp.dot(om, w2_ref[0], preferred_element_type=jnp.float32)
                 + jnp.dot(e0, w2_ref[1], preferred_element_type=jnp.float32)
                 + jnp.dot(o0, w2_ref[2], preferred_element_type=jnp.float32))
        acc_o = (jnp.dot(e0, w2_ref[0], preferred_element_type=jnp.float32)
                 + jnp.dot(o0, w2_ref[1], preferred_element_type=jnp.float32)
                 + jnp.dot(e1, w2_ref[2], preferred_element_type=jnp.float32))
        y_e = jnp.maximum(acc_e + shift, 0.0)      # conv2 even rows (post BN/ReLU)
        y_o = jnp.maximum(acc_o + shift, 0.0)      # conv2 odd rows
        return jnp.maximum(y_e, y_o).astype(o_ref.dtype)   # MaxPool1d(2,2)

    np_full, np_rem = Lo // TP, Lo % TP

    def pool_tile(t):
        p0 = _aligned(t * TP)
        o_ref[0, pl.ds(p0, TP), :] = conv2_pool(p0, TP, t2_b)

    _tiled_loop(np_full, pool_tile)
    if np_rem:
        p0 = np_full * TP
        o_ref[0, pl.ds(p0, np_rem), :] = conv2_pool(p0, np_rem, t2)


# ----------------------------------------------------------------------------
# Wrappers: layout plumbing, BN folding, pallas_call
# ----------------------------------------------------------------------------
def encoder_block_nlc(x_nlc, params):
    """Fused EncoderBlock on NLC activations.

    x_nlc: (N, L, C_in) float.  Returns (N, L//2, C_out) bf16 in NLC layout so stacked
    EncoderBlocks can chain without per-block NCL<->NLC transposes / f32 writebacks.
    """
    w1, b1 = params["conv1"]["w"], params["conv1"]["b"]   # (Cout, Cin, 3), (Cout,)
    w2, b2 = params["conv2"]["w"], params["conv2"]["b"]   # (Cout, Cout, 3), (Cout,)
    bn1, bn2 = params["bn1"], params["bn2"]

    N, L, Cin = x_nlc.shape
    Cout = w1.shape[0]
    assert L >= 2, "MaxPool1d(kernel_size=2, stride=2) needs L >= 2"
    Lo = L // 2               # pooled length (floor mode, matches PyTorch)
    NE = (L + 1) // 2         # even conv1 rows h[0], h[2], ...
    NO = L // 2               # odd  conv1 rows h[1], h[3], ...
    Cout_p = _round_up(Cout, 128)

    xb = x_nlc.astype(jnp.bfloat16)

    # Fold BatchNorm1d(eval) + conv bias: scale goes into the weights, shift is added
    # in-kernel (epilogue becomes add + ReLU only).
    def bn_fold(b, bn):
        scale = bn["gamma"] / jnp.sqrt(bn["running_var"] + 1e-5)
        shift = (b - bn["running_mean"]) * scale + bn["beta"]
        return scale, shift

    s1, t1 = bn_fold(b1, bn1)
    s2, t2 = bn_fold(b2, bn2)

    use_im2col = 3 * Cin <= 128
    if use_im2col:
        # Fold the 3 conv1 taps into the (already 128-padded) lane dim and de-interleave
        # rows into even/odd banks: zero extra HBM bytes, 3x fewer conv1 MXU passes.
        K1, K1_p, taps1 = 3 * Cin, 128, 1
        xlp = jnp.pad(xb, ((0, 0), (1, 1), (0, 0)))
        xk = jnp.concatenate([xlp[:, k:k + L, :] for k in range(3)], axis=-1)
        xk = jnp.pad(xk, ((0, 0), (0, 0), (0, K1_p - K1)))
        XE_rows, XO_rows = _round_up(NE, 8), _round_up(NO, 8)
        xe = jnp.pad(xk[:, 0::2, :], ((0, 0), (0, XE_rows - NE), (0, 0)))
        xo = jnp.pad(xk[:, 1::2, :], ((0, 0), (0, XO_rows - NO), (0, 0)))
        w1m = jnp.transpose(w1, (2, 1, 0)).reshape(K1, Cout) * s1[None, :]
        w1p = jnp.pad(w1m, ((0, K1_p - K1), (0, Cout_p - Cout))).astype(jnp.bfloat16)[None]
    else:
        # Generic path: de-interleaved x banks (with zero halo rows), 3-tap conv1.
        K1_p, taps1 = _round_up(Cin, 128), 3
        xcp = jnp.pad(xb, ((0, 0), (0, 0), (0, K1_p - Cin)))
        XE_rows, XO_rows = _round_up(NE + 1, 8), _round_up(NO + 2, 8)
        xe = jnp.pad(xcp[:, 0::2, :], ((0, 0), (0, XE_rows - NE), (0, 0)))      # xE[q]=x[2q]
        xo = jnp.pad(xcp[:, 1::2, :], ((0, 0), (1, XO_rows - NO - 1), (0, 0)))  # row0=0, xO[m]=x[2m+1]
        w1t = jnp.transpose(w1, (2, 1, 0)) * s1[None, None, :]
        w1p = jnp.pad(w1t, ((0, 0), (0, K1_p - Cin), (0, Cout_p - Cout))).astype(jnp.bfloat16)

    w2t = jnp.transpose(w2, (2, 1, 0)) * s2[None, None, :]
    w2p = jnp.pad(w2t, ((0, 0), (0, Cout_p - Cout), (0, Cout_p - Cout))).astype(jnp.bfloat16)
    t1p = jnp.pad(t1, (0, Cout_p - Cout)).reshape(1, Cout_p).astype(jnp.float32)
    t2p = jnp.pad(t2, (0, Cout_p - Cout)).reshape(1, Cout_p).astype(jnp.float32)

    TQ = min(128, _round_up(NE, 8))   # conv1 rows per tile (acc <= 16 vregs)
    TP = min(64, _round_up(Lo, 8))    # pooled rows per tile (two accs <= 16 vregs)
    HE_rows = _round_up(Lo, 8) + 8    # even h bank (+ zero halo row h[2*Lo])
    HO_rows = _round_up(Lo, 8) + 8    # odd  h bank (+ zero halo row h[-1])

    # VMEM budget: double-buffered blocks + scratch banks + live tiles, with headroom.
    est = (2 * (XE_rows + XO_rows) * K1_p * 2
           + 2 * (taps1 * K1_p + 3 * Cout_p) * Cout_p * 2
           + 2 * 2 * 8 * 128 * 4
           + 2 * Lo * Cout_p * 2
           + (HE_rows + HO_rows) * Cout_p * 2
           + (3 * TQ + 8 * TP) * Cout_p * 4)
    vmem_limit = int(min(max(est * 5 // 4, 32 * 1024 * 1024), 100 * 1024 * 1024))

    kernel = functools.partial(_encoder_block_kernel, taps1=taps1,
                               NE=NE, NO=NO, Lo=Lo, TQ=TQ, TP=TP)
    out = pl.pallas_call(
        kernel,
        out_shape=jax.ShapeDtypeStruct((N, Lo, Cout_p), jnp.bfloat16),
        grid=(N,),
        in_specs=[
            pl.BlockSpec((1, XE_rows, K1_p), lambda b: (b, 0, 0)),
            pl.BlockSpec((1, XO_rows, K1_p), lambda b: (b, 0, 0)),
            pl.BlockSpec((taps1, K1_p, Cout_p), lambda b: (0, 0, 0)),
            pl.BlockSpec((1, Cout_p), lambda b: (0, 0)),
            pl.BlockSpec((3, Cout_p, Cout_p), lambda b: (0, 0, 0)),
            pl.BlockSpec((1, Cout_p), lambda b: (0, 0)),
        ],
        out_specs=pl.BlockSpec((1, Lo, Cout_p), lambda b: (b, 0, 0)),
        scratch_shapes=[
            pltpu.VMEM((HE_rows, Cout_p), jnp.bfloat16),   # conv1 output, even rows
            pltpu.VMEM((HO_rows, Cout_p), jnp.bfloat16),   # conv1 output, odd rows
        ],
        compiler_params=pltpu.CompilerParams(
            dimension_semantics=("parallel",),
            vmem_limit_bytes=vmem_limit,
        ),
    )(xe, xo, w1p, t1p, w2p, t2p)

    return out[:, :, :Cout]


def encoder_block(x, params):
    """x: (N, C_in, L) f32 NCL (like nn.Conv1d). Returns (N, C_out, L//2) f32 NCL."""
    y = encoder_block_nlc(jnp.transpose(x, (0, 2, 1)), params)
    return jnp.transpose(y, (0, 2, 1)).astype(jnp.float32)


# ----------------------------------------------------------------------------
# Pure-JAX reference (f32) and deterministic parameter init
# ----------------------------------------------------------------------------
def _reference_encoder_block(x, params):
    def conv_bn_relu(z, cp, bnp):
        w, b = cp["w"], cp["b"]
        _, _, L = z.shape
        zp = jnp.pad(z, ((0, 0), (0, 0), (1, 1)))
        y = sum(jnp.einsum("ncl,oc->nol", zp[:, :, k:k + L], w[:, :, k],
                           precision=jax.lax.Precision.HIGHEST) for k in range(3))
        y = y + b[None, :, None]
        scale = bnp["gamma"] / jnp.sqrt(bnp["running_var"] + 1e-5)
        y = (y - bnp["running_mean"][None, :, None]) * scale[None, :, None] + bnp["beta"][None, :, None]
        return jnp.maximum(y, 0.0)

    z = conv_bn_relu(x, params["conv1"], params["bn1"])
    z = conv_bn_relu(z, params["conv2"], params["bn2"])
    N, C, L = z.shape
    return jnp.max(z[:, :, :2 * (L // 2)].reshape(N, C, L // 2, 2), axis=-1)


def init_params(key, in_channels, out_channels):
    k1, k2, k3, k4 = jax.random.split(key, 4)

    def conv(k, cin, cout):
        kw, kb = jax.random.split(k)
        return {"w": 0.05 * jax.random.normal(kw, (cout, cin, 3), jnp.float32),
                "b": 0.05 * jax.random.normal(kb, (cout,), jnp.float32)}

    def bn(k, c):
        kg, kb = jax.random.split(k)
        return {"gamma": 1.0 + 0.02 * jax.random.normal(kg, (c,), jnp.float32),
                "beta": 0.02 * jax.random.normal(kb, (c,), jnp.float32),
                "running_mean": jnp.zeros((c,), jnp.float32),
                "running_var": jnp.ones((c,), jnp.float32)}

    return {"conv1": conv(k1, in_channels, out_channels), "bn1": bn(k2, out_channels),
            "conv2": conv(k3, out_channels, out_channels), "bn2": bn(k4, out_channels)}


if __name__ == "__main__":
    key = jax.random.PRNGKey(0)
    kp1, kx1, kp2, kx2 = jax.random.split(key, 4)

    # Case 1: small-Cin stem block (3*Cin <= 128 -> im2col conv1 path).
    N, Cin, Cout, L = 2, 4, 64, 16
    params1 = init_params(kp1, Cin, Cout)
    x1 = jax.random.normal(kx1, (N, Cin, L), jnp.float32)
    out1 = jax.block_until_ready(jax.jit(lambda xx: encoder_block(xx, params1))(x1))
    assert out1.shape == (N, Cout, L // 2), out1.shape
    assert bool(jnp.all(jnp.isfinite(out1)))
    ref1 = _reference_encoder_block(x1, params1)
    err1 = float(jnp.max(jnp.abs(out1 - ref1)))
    assert err1 < 5e-2, f"case1 max abs err {err1}"

    # Case 2: wide-Cin interior block (3*Cin > 128 -> 3-tap conv1 path), non-multiple-of-8
    # length exercising the partial-tile / halo handling.
    N2, Cin2, Cout2, L2 = 2, 48, 32, 10
    params2 = init_params(kp2, Cin2, Cout2)
    x2 = jax.random.normal(kx2, (N2, Cin2, L2), jnp.float32)
    out2 = jax.block_until_ready(jax.jit(lambda xx: encoder_block(xx, params2))(x2))
    assert out2.shape == (N2, Cout2, L2 // 2), out2.shape
    assert bool(jnp.all(jnp.isfinite(out2)))
    ref2 = _reference_encoder_block(x2, params2)
    err2 = float(jnp.max(jnp.abs(out2 - ref2)))
    assert err2 < 5e-2, f"case2 max abs err {err2}"

    print("KERNEL_OK")
</pallas_src>

<mosaic_0001>
module attributes {stable_mosaic.version = 11 : i64} {
  func.func @_encoder_block_kernel(%arg0: i32, %arg1: memref<1x8x128xbf16, #tpu.memory_space<vmem>>, %arg2: memref<1x8x128xbf16, #tpu.memory_space<vmem>>, %arg3: memref<1x128x128xbf16, #tpu.memory_space<vmem>>, %arg4: memref<1x128xf32, #tpu.memory_space<vmem>>, %arg5: memref<3x128x128xbf16, #tpu.memory_space<vmem>>, %arg6: memref<1x128xf32, #tpu.memory_space<vmem>>, %arg7: memref<1x8x128xbf16, #tpu.memory_space<vmem>>, %arg8: memref<16x128xbf16, #tpu.memory_space<vmem>>, %arg9: memref<16x128xbf16, #tpu.memory_space<vmem>>) attributes {dimension_semantics = [#tpu.dimension_semantics<parallel>], iteration_bounds = array<i64: 2>, scalar_prefetch = 0 : i64, scratch_operands = 2 : i64, tpu.core_type = #tpu.core_type<tc>, window_params = [{transform_indices = @transform_0, window_bounds = array<i64: 1, 8, 128>}, {transform_indices = @transform_1, window_bounds = array<i64: 1, 8, 128>}, {pipeline_mode = #tpu.pipeline_mode<synchronous>, transform_indices = @transform_2, window_bounds = array<i64: 1, 128, 128>}, {pipeline_mode = #tpu.pipeline_mode<synchronous>, transform_indices = @transform_3, window_bounds = array<i64: 1, 128>}, {pipeline_mode = #tpu.pipeline_mode<synchronous>, transform_indices = @transform_4, window_bounds = array<i64: 3, 128, 128>}, {pipeline_mode = #tpu.pipeline_mode<synchronous>, transform_indices = @transform_5, window_bounds = array<i64: 1, 128>}, {transform_indices = @transform_6, window_bounds = array<i64: 1, 8, 128>}]} {
    %c0 = arith.constant 0 : index
    %c0_0 = arith.constant 0 : index
    %0 = vector.load %arg4[%c0, %c0_0] : memref<1x128xf32, #tpu.memory_space<vmem>>, vector<1x128xf32>
    %c0_1 = arith.constant 0 : index
    %c0_2 = arith.constant 0 : index
    %1 = vector.load %arg6[%c0_1, %c0_2] : memref<1x128xf32, #tpu.memory_space<vmem>>, vector<1x128xf32>
    %2 = vector.shape_cast %0 : vector<1x128xf32> to vector<1x128xf32>
    %3 = vector.broadcast %2 : vector<1x128xf32> to vector<8x128xf32>
    %4 = vector.shape_cast %1 : vector<1x128xf32> to vector<1x128xf32>
    %5 = vector.broadcast %4 : vector<1x128xf32> to vector<8x128xf32>
    %cst = arith.constant 0.000000e+00 : bf16
    %6 = vector.broadcast %cst : bf16 to vector<8x128xbf16>
    %c0_3 = arith.constant 0 : index
    %c0_4 = arith.constant 0 : index
    %7 = vector.load %arg9[%c0_3, %c0_4] : memref<16x128xbf16, #tpu.memory_space<vmem>>, vector<8x128xbf16>
    tpu.vector_store %arg9[%c0_3, %c0_4], %6 {strides = array<i32>} : memref<16x128xbf16, #tpu.memory_space<vmem>>, vector<8x128xbf16>,
    %c8 = arith.constant 8 : index
    %c0_5 = arith.constant 0 : index
    %8 = vector.load %arg8[%c8, %c0_5] : memref<16x128xbf16, #tpu.memory_space<vmem>>, vector<8x128xbf16>
    tpu.vector_store %arg8[%c8, %c0_5], %6 {strides = array<i32>} : memref<16x128xbf16, #tpu.memory_space<vmem>>, vector<8x128xbf16>,
    %c0_6 = arith.constant 0 : index
    %c0_7 = arith.constant 0 : index
    %c0_8 = arith.constant 0 : index
    %9 = vector.load %arg1[%c0_6, %c0_7, %c0_8] : memref<1x8x128xbf16, #tpu.memory_space<vmem>>, vector<1x8x128xbf16>
    %10 = vector.shape_cast %9 : vector<1x8x128xbf16> to vector<8x128xbf16>
    %c0_9 = arith.constant 0 : index
    %c0_10 = arith.constant 0 : index
    %c0_11 = arith.constant 0 : index
    %11 = vector.load %arg3[%c0_9, %c0_10, %c0_11] : memref<1x128x128xbf16, #tpu.memory_space<vmem>>, vector<1x128x128xbf16>
    %12 = vector.shape_cast %11 : vector<1x128x128xbf16> to vector<128x128xbf16>
    %cst_12 = arith.constant dense<0.000000e+00> : vector<8x128xf32>
    %13 = tpu.matmul %10, %12, %cst_12 {dimension_numbers = #tpu.dot_dimension_numbers<[1], [0], [0], [1], [0, 0, 1, 1], [], []>} : vector<8x128xbf16>, vector<128x128xbf16>, vector<8x128xf32> -> vector<8x128xf32>
    %14 = arith.addf %13, %3 : vector<8x128xf32>
    %cst_13 = arith.constant 0.000000e+00 : f32
    %15 = vector.broadcast %cst_13 : f32 to vector<8x128xf32>
    %16 = arith.maximumf %14, %15 : vector<8x128xf32>
    %17 = arith.truncf %16 : vector<8x128xf32> to vector<8x128xbf16>
    %c0_14 = arith.constant 0 : index
    %c0_15 = arith.constant 0 : index
    %18 = vector.load %arg8[%c0_14, %c0_15] : memref<16x128xbf16, #tpu.memory_space<vmem>>, vector<8x128xbf16>
    tpu.vector_store %arg8[%c0_14, %c0_15], %17 {strides = array<i32>} : memref<16x128xbf16, #tpu.memory_space<vmem>>, vector<8x128xbf16>,
    %c0_16 = arith.constant 0 : index
    %c0_17 = arith.constant 0 : index
    %c0_18 = arith.constant 0 : index
    %19 = vector.load %arg2[%c0_16, %c0_17, %c0_18] : memref<1x8x128xbf16, #tpu.memory_space<vmem>>, vector<1x8x128xbf16>
    %20 = vector.shape_cast %19 : vector<1x8x128xbf16> to vector<8x128xbf16>
    %c0_19 = arith.constant 0 : index
    %c0_20 = arith.constant 0 : index
    %c0_21 = arith.constant 0 : index
    %21 = vector.load %arg3[%c0_19, %c0_20, %c0_21] : memref<1x128x128xbf16, #tpu.memory_space<vmem>>, vector<1x128x128xbf16>
    %22 = vector.shape_cast %21 : vector<1x128x128xbf16> to vector<128x128xbf16>
    %cst_22 = arith.constant dense<0.000000e+00> : vector<8x128xf32>
    %23 = tpu.matmul %20, %22, %cst_22 {dimension_numbers = #tpu.dot_dimension_numbers<[1], [0], [0], [1], [0, 0, 1, 1], [], []>} : vector<8x128xbf16>, vector<128x128xbf16>, vector<8x128xf32> -> vector<8x128xf32>
    %24 = arith.addf %23, %3 : vector<8x128xf32>
    %cst_23 = arith.constant 0.000000e+00 : f32
    %25 = vector.broadcast %cst_23 : f32 to vector<8x128xf32>
    %26 = arith.maximumf %24, %25 : vector<8x128xf32>
    %27 = arith.truncf %26 : vector<8x128xf32> to vector<8x128xbf16>
    %c8_24 = arith.constant 8 : index
    %c0_25 = arith.constant 0 : index
    %28 = vector.load %arg9[%c8_24, %c0_25] : memref<16x128xbf16, #tpu.memory_space<vmem>>, vector<8x128xbf16>
    tpu.vector_store %arg9[%c8_24, %c0_25], %27 {strides = array<i32>} : memref<16x128xbf16, #tpu.memory_space<vmem>>, vector<8x128xbf16>,
    %c0_26 = arith.constant 0 : index
    %c0_27 = arith.constant 0 : index
    %29 = vector.load %arg8[%c0_26, %c0_27] : memref<16x128xbf16, #tpu.memory_space<vmem>>, vector<8x128xbf16>
    %c1 = arith.constant 1 : index
    %c0_28 = arith.constant 0 : index
    %30 = vector.load %arg8[%c1, %c0_28] : memref<16x128xbf16, #tpu.memory_space<vmem>>, vector<8x128xbf16>
    %c7 = arith.constant 7 : index
    %c0_29 = arith.constant 0 : index
    %31 = vector.load %arg9[%c7, %c0_29] : memref<16x128xbf16, #tpu.memory_space<vmem>>, vector<8x128xbf16>
    %c8_30 = arith.constant 8 : index
    %c0_31 = arith.constant 0 : index
    %32 = vector.load %arg9[%c8_30, %c0_31] : memref<16x128xbf16, #tpu.memory_space<vmem>>, vector<8x128xbf16>
    %c0_32 = arith.constant 0 : index
    %c0_33 = arith.constant 0 : index
    %c0_34 = arith.constant 0 : index
    %33 = vector.load %arg5[%c0_32, %c0_33, %c0_34] : memref<3x128x128xbf16, #tpu.memory_space<vmem>>, vector<1x128x128xbf16>
    %34 = vector.shape_cast %33 : vector<1x128x128xbf16> to vector<128x128xbf16>
    %cst_35 = arith.constant dense<0.000000e+00> : vector<8x128xf32>
    %35 = tpu.matmul %31, %34, %cst_35 {dimension_numbers = #tpu.dot_dimension_numbers<[1], [0], [0], [1], [0, 0, 1, 1], [], []>} : vector<8x128xbf16>, vector<128x128xbf16>, vector<8x128xf32> -> vector<8x128xf32>
    %c1_36 = arith.constant 1 : index
    %c0_37 = arith.constant 0 : index
    %c0_38 = arith.constant 0 : index
    %36 = vector.load %arg5[%c1_36, %c0_37, %c0_38] : memref<3x128x128xbf16, #tpu.memory_space<vmem>>, vector<1x128x128xbf16>
    %37 = vector.shape_cast %36 : vector<1x128x128xbf16> to vector<128x128xbf16>
    %cst_39 = arith.constant dense<0.000000e+00> : vector<8x128xf32>
    %38 = tpu.matmul %29, %37, %cst_39 {dimension_numbers = #tpu.dot_dimension_numbers<[1], [0], [0], [1], [0, 0, 1, 1], [], []>} : vector<8x128xbf16>, vector<128x128xbf16>, vector<8x128xf32> -> vector<8x128xf32>
    %39 = arith.addf %35, %38 : vector<8x128xf32>
    %c2 = arith.constant 2 : index
    %c0_40 = arith.constant 0 : index
    %c0_41 = arith.constant 0 : index
    %40 = vector.load %arg5[%c2, %c0_40, %c0_41] : memref<3x128x128xbf16, #tpu.memory_space<vmem>>, vector<1x128x128xbf16>
    %41 = vector.shape_cast %40 : vector<1x128x128xbf16> to vector<128x128xbf16>
    %cst_42 = arith.constant dense<0.000000e+00> : vector<8x128xf32>
    %42 = tpu.matmul %32, %41, %cst_42 {dimension_numbers = #tpu.dot_dimension_numbers<[1], [0], [0], [1], [0, 0, 1, 1], [], []>} : vector<8x128xbf16>, vector<128x128xbf16>, vector<8x128xf32> -> vector<8x128xf32>
    %43 = arith.addf %39, %42 : vector<8x128xf32>
    %c0_43 = arith.constant 0 : index
    %c0_44 = arith.constant 0 : index
    %c0_45 = arith.constant 0 : index
    %44 = vector.load %arg5[%c0_43, %c0_44, %c0_45] : memref<3x128x128xbf16, #tpu.memory_space<vmem>>, vector<1x128x128xbf16>
    %45 = vector.shape_cast %44 : vector<1x128x128xbf16> to vector<128x128xbf16>
    %cst_46 = arith.constant dense<0.000000e+00> : vector<8x128xf32>
    %46 = tpu.matmul %29, %45, %cst_46 {dimension_numbers = #tpu.dot_dimension_numbers<[1], [0], [0], [1], [0, 0, 1, 1], [], []>} : vector<8x128xbf16>, vector<128x128xbf16>, vector<8x128xf32> -> vector<8x128xf32>
    %c1_47 = arith.constant 1 : index
    %c0_48 = arith.constant 0 : index
    %c0_49 = arith.constant 0 : index
    %47 = vector.load %arg5[%c1_47, %c0_48, %c0_49] : memref<3x128x128xbf16, #tpu.memory_space<vmem>>, vector<1x128x128xbf16>
    %48 = vector.shape_cast %47 : vector<1x128x128xbf16> to vector<128x128xbf16>
    %cst_50 = arith.constant dense<0.000000e+00> : vector<8x128xf32>
    %49 = tpu.matmul %32, %48, %cst_50 {dimension_numbers = #tpu.dot_dimension_numbers<[1], [0], [0], [1], [0, 0, 1, 1], [], []>} : vector<8x128xbf16>, vector<128x128xbf16>, vector<8x128xf32> -> vector<8x128xf32>
    %50 = arith.addf %46, %49 : vector<8x128xf32>
    %c2_51 = arith.constant 2 : index
    %c0_52 = arith.constant 0 : index
    %c0_53 = arith.constant 0 : index
    %51 = vector.load %arg5[%c2_51, %c0_52, %c0_53] : memref<3x128x128xbf16, #tpu.memory_space<vmem>>, vector<1x128x128xbf16>
    %52 = vector.shape_cast %51 : vector<1x128x128xbf16> to vector<128x128xbf16>
    %cst_54 = arith.constant dense<0.000000e+00> : vector<8x128xf32>
    %53 = tpu.matmul %30, %52, %cst_54 {dimension_numbers = #tpu.dot_dimension_numbers<[1], [0], [0], [1], [0, 0, 1, 1], [], []>} : vector<8x128xbf16>, vector<128x128xbf16>, vector<8x128xf32> -> vector<8x128xf32>
    %54 = arith.addf %50, %53 : vector<8x128xf32>
    %55 = arith.addf %43, %5 : vector<8x128xf32>
    %cst_55 = arith.constant 0.000000e+00 : f32
    %56 = vector.broadcast %cst_55 : f32 to vector<8x128xf32>
    %57 = arith.maximumf %55, %56 : vector<8x128xf32>
    %58 = arith.addf %54, %5 : vector<8x128xf32>
    %cst_56 = arith.constant 0.000000e+00 : f32
    %59 = vector.broadcast %cst_56 : f32 to vector<8x128xf32>
    %60 = arith.maximumf %58, %59 : vector<8x128xf32>
    %61 = arith.maximumf %57, %60 : vector<8x128xf32>
    %62 = arith.truncf %61 : vector<8x128xf32> to vector<8x128xbf16>
    %c0_57 = arith.constant 0 : index
    %c0_58 = arith.constant 0 : index
    %c0_59 = arith.constant 0 : index
    %63 = vector.load %arg7[%c0_57, %c0_58, %c0_59] : memref<1x8x128xbf16, #tpu.memory_space<vmem>>, vector<1x8x128xbf16>
    %64 = vector.shape_cast %63 : vector<1x8x128xbf16> to vector<8x128xbf16>
    %65 = vector.shape_cast %62 : vector<8x128xbf16> to vector<1x8x128xbf16>
    tpu.vector_store %arg7[%c0_57, %c0_58, %c0_59], %65 {strides = array<i32>} : memref<1x8x128xbf16, #tpu.memory_space<vmem>>, vector<1x8x128xbf16>,
    return
  }
  func.func @transform_0(%arg0: i32) -> (i32, i32, i32) {
    %c0_i32 = arith.constant 0 : i32
    %c0_i32_0 = arith.constant 0 : i32
    %c0_i32_1 = arith.constant 0 : i32
    return %arg0, %c0_i32, %c0_i32_0 : i32, i32, i32
  }
  func.func @transform_1(%arg0: i32) -> (i32, i32, i32) {
    %c0_i32 = arith.constant 0 : i32
    %c0_i32_0 = arith.constant 0 : i32
    %c0_i32_1 = arith.constant 0 : i32
    return %arg0, %c0_i32, %c0_i32_0 : i32, i32, i32
  }
  func.func @transform_2(%arg0: i32) -> (i32, i32, i32) {
    %c0_i32 = arith.constant 0 : i32
    %c0_i32_0 = arith.constant 0 : i32
    %c0_i32_1 = arith.constant 0 : i32
    %c0_i32_2 = arith.constant 0 : i32
    return %c0_i32, %c0_i32_0, %c0_i32_1 : i32, i32, i32
  }
  func.func @transform_3(%arg0: i32) -> (i32, i32) {
    %c0_i32 = arith.constant 0 : i32
    %c0_i32_0 = arith.constant 0 : i32
    %c0_i32_1 = arith.constant 0 : i32
    return %c0_i32, %c0_i32_0 : i32, i32
  }
  func.func @transform_4(%arg0: i32) -> (i32, i32, i32) {
    %c0_i32 = arith.constant 0 : i32
    %c0_i32_0 = arith.constant 0 : i32
    %c0_i32_1 = arith.constant 0 : i32
    %c0_i32_2 = arith.constant 0 : i32
    return %c0_i32, %c0_i32_0, %c0_i32_1 : i32, i32, i32
  }
  func.func @transform_5(%arg0: i32) -> (i32, i32) {
    %c0_i32 = arith.constant 0 : i32
    %c0_i32_0 = arith.constant 0 : i32
    %c0_i32_1 = arith.constant 0 : i32
    return %c0_i32, %c0_i32_0 : i32, i32
  }
  func.func @transform_6(%arg0: i32) -> (i32, i32, i32) {
    %c0_i32 = arith.constant 0 : i32
    %c0_i32_0 = arith.constant 0 : i32
    %c0_i32_1 = arith.constant 0 : i32
    return %arg0, %c0_i32, %c0_i32_0 : i32, i32, i32
  }
}

</mosaic_0001>

<llo_original>
// kernel: _lambda_.1
$region0: #{_lambda_.1}
  #allocation0 [shape = 'u32[]', space=smem, size = 0x4, offset = 0x4, fixed_abs, tag = 'smem constant byte address 0x4 - core index']
  #allocation1 [shape = 'u32[144,128]{1,0:T(1,128)}', space=vmem, size = 0x12000, scoped, tag = 'internal scratch']
  #allocation2 [shape = 'bf16[16,128]{1,0:T(16,128)(2,1)}', space=vmem, size = 0x1000, scoped, tag = 'scratch operand']
  #allocation3 [shape = 'bf16[16,128]{1,0:T(16,128)(2,1)}', space=vmem, size = 0x1000, scoped, tag = 'scratch operand']
  %s0 = inlined_call_operand.vmem [shape: bf16[2,8,128], index: 0, kind: input, shape index: {}]
  %s1 = inlined_call_operand.vmem [shape: bf16[2,8,128], index: 1, kind: input, shape index: {}]
  %s2 = inlined_call_operand.hbm [shape: bf16[1,128,128], index: 2, kind: input, shape index: {}]
  %s3 = inlined_call_operand.vmem [shape: f32[1,128], index: 3, kind: input, shape index: {}]
  %s4 = inlined_call_operand.vmem [shape: bf16[3,128,128], index: 4, kind: input, shape index: {}]
  %s5 = inlined_call_operand.vmem [shape: f32[1,128], index: 5, kind: input, shape index: {}]
  %s6 = inlined_call_operand.vmem [shape: bf16[2,8,128], index: 6, kind: output, shape index: {}]
  %s7 = sld [smem:[#allocation0]]
  $region61: #{_lambda_.1} parent=0
    _
  %s9 = ssub.s32 1, %s7
  %s10 = scalar_select 0, %s9, %s7
  $region1: #{_lambda_.1} parent=0
    #allocation4 [shape = 'u8[32768]{0}', space=vmem, size = 0x8000, scoped, tag = 'input window, operand 2, single buffered']
    #allocation5 [shape = 's32[2]{0}', space=sflag, size = 0x8, scoped, tag = 'scoped memory for _lambda_.1']
    %11 = vsyncpa [#allocation5], 0
    loop: start=0, step=1, limit=4
    $region2: #{_lambda_.1} parent=1 // loop_pre_header
      _
    $region3: #{_lambda_.1} parent=1 // loop_header
      %s13 = sphi 0, %s17
      %p14 = scmp.ge.s32.totalorder %s13, 4
      %s23 = sphi 0, %s25
      %s26 = sphi 0, %s23
      %s27 = sphi 0, %s26
      %s43 = sphi 0, %s27
      %s49 = sphi 0, %s51
      %s52 = sphi 0, %s49
      %s53 = sphi 0, %s52
      %s69 = sphi 0, %s53
      %s73 = sphi 0, %s73
      %s75 = sphi 0, %s73
      %s76 = sphi 0, %s75
      %s90 = sphi 0, %s76
      %s94 = sphi 0, %s94
      %s96 = sphi 0, %s94
      %s97 = sphi 0, %s96
      %s111 = sphi 0, %s97
      %s115 = sphi 0, %s115
      %s117 = sphi 0, %s115
      %s118 = sphi 0, %s117
      %s132 = sphi 0, %s118
      %s136 = sphi 0, %s136
      %s138 = sphi 0, %s136
      %s139 = sphi 0, %s138
      %s153 = sphi 0, %s139
      %s159 = sphi 0, %s161
      %s162 = sphi 0, %s159
      %s163 = sphi 0, %s162
      %s179 = sphi 0, %s163
    $region4: #{_lambda_.1} parent=1 // loop_header_branch
      %16 = sbr.rel (%p14) target = $region8
    $region5: #{_lambda_.1} parent=1 // loop_body
      %s18 = ssub.s32 %s13, 1
      %s19 = ssub.s32 %s13, 2
      %s20 = sadd.s32 %s13, 1
      %s21 = ssub.s32 %s13, %s20
      %p22 = scmp.eq.s32.totalorder %s21, 0
      %s24 = sadd.s32 %s23, 1
      %s25 = scalar_select %p22, %s23, %s24
      %p28 = pneg %p22
      %p29 = scmp.eq.s32.totalorder %s13, 1
      %p30 = por %p28, %p29
      %p31 = scmp.ne.s32.totalorder %s23, %s26
      %p32 = scmp.eq.s32.totalorder %s13, 0
      %p33 = por %p31, %p32
      %p34 = scmp.ne.s32.totalorder %s23, %s26
      %p35 = scmp.eq.s32.totalorder %s18, 1
      %p36 = por %p34, %p35
      %p37 = scmp.ne.s32.totalorder %s26, %s27
      %p38 = scmp.eq.s32.totalorder %s18, 0
      %p39 = por %p37, %p38
      %p40 = scmp.ne.s32.totalorder %s26, %s27
      %p41 = scmp.eq.s32.totalorder %s19, 1
      %p42 = por %p40, %p41
      %p44 = scmp.ne.s32.totalorder %s27, %s43
      %p45 = scmp.eq.s32.totalorder %s19, 0
      %p46 = por %p44, %p45
      %s47 = ssub.s32 %s13, %s20
      %p48 = scmp.eq.s32.totalorder %s47, 0
      %s50 = sadd.s32 %s49, 1
      %s51 = scalar_select %p48, %s49, %s50
      %p54 = pneg %p48
      %p55 = scmp.eq.s32.totalorder %s13, 1
      %p56 = por %p54, %p55
      %p57 = scmp.ne.s32.totalorder %s49, %s52
      %p58 = scmp.eq.s32.totalorder %s13, 0
      %p59 = por %p57, %p58
      %p60 = scmp.ne.s32.totalorder %s49, %s52
      %p61 = scmp.eq.s32.totalorder %s18, 1
      %p62 = por %p60, %p61
      %p63 = scmp.ne.s32.totalorder %s52, %s53
      %p64 = scmp.eq.s32.totalorder %s18, 0
      %p65 = por %p63, %p64
      %p66 = scmp.ne.s32.totalorder %s52, %s53
      %p67 = scmp.eq.s32.totalorder %s19, 1
      %p68 = por %p66, %p67
      %p70 = scmp.ne.s32.totalorder %s53, %s69
      %p71 = scmp.eq.s32.totalorder %s19, 0
      %p72 = por %p70, %p71
      %s74 = sadd.s32 %s73, 1
      %p77 = scmp.eq.s32.totalorder %s13, 1
      %p78 = scmp.ne.s32.totalorder %s73, %s75
      %p79 = scmp.eq.s32.totalorder %s13, 0
      %p80 = por %p78, %p79
      %p81 = scmp.ne.s32.totalorder %s73, %s75
      %p82 = scmp.eq.s32.totalorder %s18, 1
      %p83 = por %p81, %p82
      %p84 = scmp.ne.s32.totalorder %s75, %s76
      %p85 = scmp.eq.s32.totalorder %s18, 0
      %p86 = por %p84, %p85
      %p87 = scmp.ne.s32.totalorder %s75, %s76
      %p88 = scmp.eq.s32.totalorder %s19, 1
      %p89 = por %p87, %p88
      %p91 = scmp.ne.s32.totalorder %s76, %s90
      %p92 = scmp.eq.s32.totalorder %s19, 0
      %p93 = por %p91, %p92
      %s95 = sadd.s32 %s94, 1
      %p98 = scmp.eq.s32.totalorder %s13, 1
      %p99 = scmp.ne.s32.totalorder %s94, %s96
      %p100 = scmp.eq.s32.totalorder %s13, 0
      %p101 = por %p99, %p100
      %p102 = scmp.ne.s32.totalorder %s94, %s96
      %p103 = scmp.eq.s32.totalorder %s18, 1
      %p104 = por %p102, %p103
      %p105 = scmp.ne.s32.totalorder %s96, %s97
      %p106 = scmp.eq.s32.totalorder %s18, 0
      %p107 = por %p105, %p106
      %p108 = scmp.ne.s32.totalorder %s96, %s97
      %p109 = scmp.eq.s32.totalorder %s19, 1
      %p110 = por %p108, %p109
      %p112 = scmp.ne.s32.totalorder %s97, %s111
      %p113 = scmp.eq.s32.totalorder %s19, 0
      %p114 = por %p112, %p113
      %s116 = sadd.s32 %s115, 1
      %p119 = scmp.eq.s32.totalorder %s13, 1
      %p120 = scmp.ne.s32.totalorder %s115, %s117
      %p121 = scmp.eq.s32.totalorder %s13, 0
      %p122 = por %p120, %p121
      %p123 = scmp.ne.s32.totalorder %s115, %s117
      %p124 = scmp.eq.s32.totalorder %s18, 1
      %p125 = por %p123, %p124
      %p126 = scmp.ne.s32.totalorder %s117, %s118
      %p127 = scmp.eq.s32.totalorder %s18, 0
      %p128 = por %p126, %p127
      %p129 = scmp.ne.s32.totalorder %s117, %s118
      %p130 = scmp.eq.s32.totalorder %s19, 1
      %p131 = por %p129, %p130
      %p133 = scmp.ne.s32.totalorder %s118, %s132
      %p134 = scmp.eq.s32.totalorder %s19, 0
      %p135 = por %p133, %p134
      %s137 = sadd.s32 %s136, 1
      %p140 = scmp.eq.s32.totalorder %s13, 1
      %p141 = scmp.ne.s32.totalorder %s136, %s138
      %p142 = scmp.eq.s32.totalorder %s13, 0
      %p143 = por %p141, %p142
      %p144 = scmp.ne.s32.totalorder %s136, %s138
      %p145 = scmp.eq.s32.totalorder %s18, 1
      %p146 = por %p144, %p145
      %p147 = scmp.ne.s32.totalorder %s138, %s139
      %p148 = scmp.eq.s32.totalorder %s18, 0
      %p149 = por %p147, %p148
      %p150 = scmp.ne.s32.totalorder %s138, %s139
      %p151 = scmp.eq.s32.totalorder %s19, 1
      %p152 = por %p150, %p151
      %p154 = scmp.ne.s32.totalorder %s139, %s153
      %p155 = scmp.eq.s32.totalorder %s19, 0
      %p156 = por %p154, %p155
      %s157 = ssub.s32 %s13, %s20
      %p158 = scmp.eq.s32.totalorder %s157, 0
      %s160 = sadd.s32 %s159, 1
      %s161 = scalar_select %p158, %s159, %s160
      %p164 = pneg %p158
      %p165 = scmp.eq.s32.totalorder %s13, 1
      %p166 = por %p164, %p165
      %p167 = scmp.ne.s32.totalorder %s159, %s162
      %p168 = scmp.eq.s32.totalorder %s13, 0
      %p169 = por %p167, %p168
      %p170 = scmp.ne.s32.totalorder %s159, %s162
      %p171 = scmp.eq.s32.totalorder %s18, 1
      %p172 = por %p170, %p171
      %p173 = scmp.ne.s32.totalorder %s162, %s163
      %p174 = scmp.eq.s32.totalorder %s18, 0
      %p175 = por %p173, %p174
      %p176 = scmp.ne.s32.totalorder %s162, %s163
      %p177 = scmp.eq.s32.totalorder %s19, 1
      %p178 = por %p176, %p177
      %p180 = scmp.ne.s32.totalorder %s163, %s179
      %p181 = scmp.eq.s32.totalorder %s19, 0
      %p182 = por %p180, %p181
      %p183 = scmp.le.s32.totalorder 1, %s13
      %p184 = scmp.lt.s32.totalorder %s13, 3
      %p185 = pnand %p183, %p184
      %p186 = pneg %p185
      // Predicated region
      $region9: #{_lambda_.1} parent=5 // pred_check
        _
      $region10: #{_lambda_.1} parent=5 // pred_check_branch
        %188 = sbr.rel (%p185) target = $region12
      $region11: #{_lambda_.1} parent=5 // pred_region
        %s189 = ssub.s32 %s13, 1
        // Predicated region
        $region13: #{_lambda_.1} parent=11 // pred_check
          %p190 = pneg %p86
        $region14: #{_lambda_.1} parent=11 // pred_check_branch
          %192 = sbr.rel (%p190) target = $region16
        $region15: #{_lambda_.1} parent=11 // pred_region
          %s194 = ssub.s32 1024, 1024
          %195 = vsyncadd [#allocation5], %s194
          %s196 = sshll.u32 [#allocation4], 4
          %s197 = int_to_ptr.vmem [resolvable:$true] %s196
          %202 = dma.hbm_to_vmem [thread:$0]  %s2, 1024, %s197, [#allocation5], 64, 64, 4
        $region16: #{_lambda_.1} parent=11 // pred_fallthru
          _
        // Predicated region
        $region17: #{_lambda_.1} parent=11 // pred_check
          %p203 = pneg %p107
        $region18: #{_lambda_.1} parent=11 // pred_check_branch
          %205 = sbr.rel (%p203) target = $region20
        $region19: #{_lambda_.1} parent=11 // pred_region
          _
        $region20: #{_lambda_.1} parent=11 // pred_fallthru
          _
        // Predicated region
        $region21: #{_lambda_.1} parent=11 // pred_check
          %p206 = pneg %p128
        $region22: #{_lambda_.1} parent=11 // pred_check_branch
          %208 = sbr.rel (%p206) target = $region24
        $region23: #{_lambda_.1} parent=11 // pred_region
          _
        $region24: #{_lambda_.1} parent=11 // pred_fallthru
          _
        // Predicated region
        $region25: #{_lambda_.1} parent=11 // pred_check
          %p209 = pneg %p149
        $region26: #{_lambda_.1} parent=11 // pred_check_branch
          %211 = sbr.rel (%p209) target = $region28
        $region27: #{_lambda_.1} parent=11 // pred_region
          _
        $region28: #{_lambda_.1} parent=11 // pred_fallthru
          _
      $region12: #{_lambda_.1} parent=5 // pred_fallthru
        _
      %p212 = scmp.lt.s32.totalorder %s13, 2
      // Predicated region
      $region29: #{_lambda_.1} parent=5 // pred_check
        %p213 = pneg %p212
      $region30: #{_lambda_.1} parent=5 // pred_check_branch
        %215 = sbr.rel (%p213) target = $region32
      $region31: #{_lambda_.1} parent=5 // pred_region
        // Predicated region
        $region33: #{_lambda_.1} parent=31 // pred_check
          %p216 = pneg %p33
        $region34: #{_lambda_.1} parent=31 // pred_check_branch
          %218 = sbr.rel (%p216) target = $region36
        $region35: #{_lambda_.1} parent=31 // pred_region
          %p219 = scmp.lt.s32.totalorder %s13, 1
          %s220 = scalar_select %p219, %s13, 1
          %s221 = smul.addr %s220, 4
          %s222 = scalar_lea.vmem %s0, %s221
        $region36: #{_lambda_.1} parent=31 // pred_fallthru
          _
        // Predicated region
        $region37: #{_lambda_.1} parent=31 // pred_check
          %p223 = pneg %p59
        $region38: #{_lambda_.1} parent=31 // pred_check_branch
          %225 = sbr.rel (%p223) target = $region40
        $region39: #{_lambda_.1} parent=31 // pred_region
          %p226 = scmp.lt.s32.totalorder %s13, 1
          %s227 = scalar_select %p226, %s13, 1
          %s228 = smul.addr %s227, 4
          %s229 = scalar_lea.vmem %s1, %s228
        $region40: #{_lambda_.1} parent=31 // pred_fallthru
          _
      $region32: #{_lambda_.1} parent=5 // pred_fallthru
        _
      %p230 = scmp.le.s32.totalorder 1, %s13
      %p231 = scmp.lt.s32.totalorder %s13, 3
      %p232 = pnand %p230, %p231
      %p233 = pneg %p232
      // Predicated region
      $region41: #{_lambda_.1} parent=5 // pred_check
        _
      $region42: #{_lambda_.1} parent=5 // pred_check_branch
        %235 = sbr.rel (%p232) target = $region44
      $region43: #{_lambda_.1} parent=5 // pred_region
        %s236 = ssub.s32 %s13, 1
        // Predicated region
        $region45: #{_lambda_.1} parent=43 // pred_check
          %p237 = pneg %p86
        $region46: #{_lambda_.1} parent=43 // pred_check_branch
          %239 = sbr.rel (%p237) target = $region48
        $region47: #{_lambda_.1} parent=43 // pred_region
          %240 = dma.done [#allocation5], 1024
        $region48: #{_lambda_.1} parent=43 // pred_fallthru
          _
        %p241 = scmp.lt.s32.totalorder %s18, 1
        %s242 = scalar_select %p241, %s18, 1
        %s243 = smul.addr %s242, 4
        %s244 = scalar_lea.vmem %s0, %s243
        %p245 = pneg %p39
        %p246 = pneg %p36
        %p247 = scmp.lt.s32.totalorder %s18, 1
        %s248 = scalar_select %p247, %s18, 1
        %s249 = smul.addr %s248, 4
        %s250 = scalar_lea.vmem %s1, %s249
        %p251 = pneg %p65
        %p252 = pneg %p62
        %p253 = pneg %p86
        %p254 = pneg %p83
        %p255 = pneg %p107
        %p256 = pneg %p104
        %p257 = pneg %p128
        %p258 = pneg %p125
        %p259 = pneg %p149
        %p260 = pneg %p146
        %p261 = pneg %p175
        %p262 = pneg %p172
        %p263 = scmp.lt.s32.totalorder %s18, 1
        %s264 = scalar_select %p263, %s18, 1
        %s265 = smul.addr %s264, 4
        %s266 = scalar_lea.vmem %s6, %s265
        %p267 = scmp.lt.s32.totalorder %s18, 1
        %s268 = scalar_select %p267, %s18, 1
        %s269 = smul.addr %s268, 4
        %s270 = scalar_lea.vmem %s0, %s269
        %p271 = scmp.lt.s32.totalorder %s18, 1
        %s272 = scalar_select %p271, %s18, 1
        %s273 = smul.addr %s272, 4
        %s274 = scalar_lea.vmem %s1, %s273
        %p275 = scmp.lt.s32.totalorder %s18, 1
        %s276 = scalar_select %p275, %s18, 1
        %s277 = smul.addr %s276, 4
        %s278 = scalar_lea.vmem %s6, %s277
        %v280 = vld [vmem:[%s3] sm:$0x1]
        %v281 = vld [vmem:[%s5] sm:$0x1]
        %v283 = vlaneseq
        %v284 = vshrl.u32 %v283, 7
        %v285 = vsub.s32 0, %v284
        %v286 = vrot.slane %v280, %v285
        %v289 = vlaneseq
        %v290 = vshrl.u32 %v289, 7
        %v291 = vsub.s32 0, %v290
        %v292 = vrot.slane %v281, %v291
        %294 = vst [vmem:[#allocation3] sm:$0xf] 0
        %295 = vst [vmem:[#allocation2] sm:$0xf0] 0
        %v296 = vld [vmem:[%s270] sm:$0xf]
        %v297 = vld [vmem:[#allocation4] sm:$0xf]
        %v298 = vld [vmem:[#allocation4 + $0x4] sm:$0xf]
        %v299 = vld [vmem:[#allocation4 + $0x8] sm:$0xf]
        %v300 = vld [vmem:[#allocation4 + $0xc] sm:$0xf]
        %v301 = vld [vmem:[#allocation4 + $0x10] sm:$0xf]
        %v302 = vld [vmem:[#allocation4 + $0x14] sm:$0xf]
        %v303 = vld [vmem:[#allocation4 + $0x18] sm:$0xf]
        %v304 = vld [vmem:[#allocation4 + $0x1c] sm:$0xf]
        %v305 = vld [vmem:[#allocation4 + $0x20] sm:$0xf]
        %v306 = vld [vmem:[#allocation4 + $0x24] sm:$0xf]
        %v307 = vld [vmem:[#allocation4 + $0x28] sm:$0xf]
        %v308 = vld [vmem:[#allocation4 + $0x2c] sm:$0xf]
        %v309 = vld [vmem:[#allocation4 + $0x30] sm:$0xf]
        %v310 = vld [vmem:[#allocation4 + $0x34] sm:$0xf]
        %v311 = vld [vmem:[#allocation4 + $0x38] sm:$0xf]
        %v312 = vld [vmem:[#allocation4 + $0x3c] sm:$0xf]
        %v329 = vunpack.c.l.b16 %v297
        %v330 = vunpack.c.l.b16 %v298
        %v331 = vunpack.c.l.b16 %v299
        %v332 = vunpack.c.l.b16 %v300
        %v333 = vunpack.c.l.b16 %v301
        %v334 = vunpack.c.l.b16 %v302
        %v335 = vunpack.c.l.b16 %v303
        %v336 = vunpack.c.l.b16 %v304
        %v337 = vunpack.c.l.b16 %v305
        %v338 = vunpack.c.l.b16 %v306
        %v339 = vunpack.c.l.b16 %v307
        %v340 = vunpack.c.l.b16 %v308
        %v341 = vunpack.c.l.b16 %v309
        %v342 = vunpack.c.l.b16 %v310
        %v343 = vunpack.c.l.b16 %v311
        %v344 = vunpack.c.l.b16 %v312
        %v345 = vpack.c.b16 %v330, %v329
        %v346 = vpack.c.b16 %v332, %v331
        %v347 = vpack.c.b16 %v334, %v333
        %v348 = vpack.c.b16 %v336, %v335
        %v349 = vpack.c.b16 %v338, %v337
        %v350 = vpack.c.b16 %v340, %v339
        %v351 = vpack.c.b16 %v342, %v341
        %v352 = vpack.c.b16 %v344, %v343
        %361 = vmatprep.subr.bf16.mxu0 0
        %362 = vmatpush1.bf16.msra.mxu0 %v345
        %363 = vmatprep.subr.bf16.mxu0 0
        %364 = vmatpush1.bf16.msra.mxu0 %v346
        %365 = vmatprep.subr.bf16.mxu0 0
        %366 = vmatpush1.bf16.msra.mxu0 %v347
        %367 = vmatprep.subr.bf16.mxu0 0
        %368 = vmatpush1.bf16.msra.mxu0 %v348
        %369 = vmatprep.subr.bf16.mxu0 0
        %370 = vmatpush1.bf16.msra.mxu0 %v349
        %371 = vmatprep.subr.bf16.mxu0 0
        %372 = vmatpush1.bf16.msra.mxu0 %v350
        %373 = vmatprep.subr.bf16.mxu0 0
        %374 = vmatpush1.bf16.msra.mxu0 %v351
        %375 = vmatprep.subr.bf16.mxu0 0
        %376 = vmatpush1.bf16.msra.mxu0 %v352
        %377 = vmatprep.subr.bf16.mxu0 0
        %378 = vmatpush1.bf16.msra.mxu0 0
        %379 = vmatprep.subr.bf16.mxu0 0
        %380 = vmatpush1.bf16.msra.mxu0 0
        %381 = vmatprep.subr.bf16.mxu0 0
        %382 = vmatpush1.bf16.msra.mxu0 0
        %383 = vmatprep.subr.bf16.mxu0 0
        %384 = vmatpush1.bf16.msra.mxu0 0
        %385 = vmatprep.subr.bf16.mxu0 0
        %386 = vmatpush1.bf16.msra.mxu0 0
        %387 = vmatprep.subr.bf16.mxu0 0
        %388 = vmatpush1.bf16.msra.mxu0 0
        %389 = vmatprep.subr.bf16.mxu0 0
        %390 = vmatpush1.bf16.msra.mxu0 0
        %391 = vmatprep.subr.bf16.mxu0 0
        %392 = vmatpush1.bf16.msra.mxu0 0
        %393 = vmatprep.mubr.bf16.mxu0 0
        %394 = vmatmul.mubr.bf16.gmra.mrb[0].mxu0 %v296
        %v395 = vpop.f32.mrb[0].mxu0
        %v396 = vadd.f32 %v286, %v395
        %v397 = vpop.f32.mrb[0].mxu0
        %v398 = vpop.f32.mrb[0].mxu0
        %v399 = vpop.f32.mrb[0].mxu0
        %400 = vdwg.mxu0
        %v401 = vmax.f32 %v396, 0.0
        %v402 = vpack.c.bf16 %v401, %v401
        %403 = vst [vmem:[#allocation2] sm:$0xf] %v402
        %v404 = vld [vmem:[%s274] sm:$0xf]
        %v405 = vld [vmem:[#allocation4] sm:$0xf]
        %v406 = vld [vmem:[#allocation4 + $0x4] sm:$0xf]
        %v407 = vld [vmem:[#allocation4 + $0x8] sm:$0xf]
        %v408 = vld [vmem:[#allocation4 + $0xc] sm:$0xf]
        %v409 = vld [vmem:[#allocation4 + $0x10] sm:$0xf]
        %v410 = vld [vmem:[#allocation4 + $0x14] sm:$0xf]
        %v411 = vld [vmem:[#allocation4 + $0x18] sm:$0xf]
        %v412 = vld [vmem:[#allocation4 + $0x1c] sm:$0xf]
        %v413 = vld [vmem:[#allocation4 + $0x20] sm:$0xf]
        %v414 = vld [vmem:[#allocation4 + $0x24] sm:$0xf]
        %v415 = vld [vmem:[#allocation4 + $0x28] sm:$0xf]
        %v416 = vld [vmem:[#allocation4 + $0x2c] sm:$0xf]
        %v417 = vld [vmem:[#allocation4 + $0x30] sm:$0xf]
        %v418 = vld [vmem:[#allocation4 + $0x34] sm:$0xf]
        %v419 = vld [vmem:[#allocation4 + $0x38] sm:$0xf]
        %v420 = vld [vmem:[#allocation4 + $0x3c] sm:$0xf]
        %v437 = vunpack.c.l.b16 %v405
        %v438 = vunpack.c.l.b16 %v406
        %v439 = vunpack.c.l.b16 %v407
        %v440 = vunpack.c.l.b16 %v408
        %v441 = vunpack.c.l.b16 %v409
        %v442 = vunpack.c.l.b16 %v410
        %v443 = vunpack.c.l.b16 %v411
        %v444 = vunpack.c.l.b16 %v412
        %v445 = vunpack.c.l.b16 %v413
        %v446 = vunpack.c.l.b16 %v414
        %v447 = vunpack.c.l.b16 %v415
        %v448 = vunpack.c.l.b16 %v416
        %v449 = vunpack.c.l.b16 %v417
        %v450 = vunpack.c.l.b16 %v418
        %v451 = vunpack.c.l.b16 %v419
        %v452 = vunpack.c.l.b16 %v420
        %v453 = vpack.c.b16 %v438, %v437
        %v454 = vpack.c.b16 %v440, %v439
        %v455 = vpack.c.b16 %v442, %v441
        %v456 = vpack.c.b16 %v444, %v443
        %v457 = vpack.c.b16 %v446, %v445
        %v458 = vpack.c.b16 %v448, %v447
        %v459 = vpack.c.b16 %v450, %v449
        %v460 = vpack.c.b16 %v452, %v451
        %469 = vmatprep.subr.bf16.mxu0 0
        %470 = vmatpush1.bf16.msra.mxu0 %v453
        %471 = vmatprep.subr.bf16.mxu0 0
        %472 = vmatpush1.bf16.msra.mxu0 %v454
        %473 = vmatprep.subr.bf16.mxu0 0
        %474 = vmatpush1.bf16.msra.mxu0 %v455
        %475 = vmatprep.subr.bf16.mxu0 0
        %476 = vmatpush1.bf16.msra.mxu0 %v456
        %477 = vmatprep.subr.bf16.mxu0 0
        %478 = vmatpush1.bf16.msra.mxu0 %v457
        %479 = vmatprep.subr.bf16.mxu0 0
        %480 = vmatpush1.bf16.msra.mxu0 %v458
        %481 = vmatprep.subr.bf16.mxu0 0
        %482 = vmatpush1.bf16.msra.mxu0 %v459
        %483 = vmatprep.subr.bf16.mxu0 0
        %484 = vmatpush1.bf16.msra.mxu0 %v460
        %485 = vmatprep.subr.bf16.mxu0 0
        %486 = vmatpush1.bf16.msra.mxu0 0
        %487 = vmatprep.subr.bf16.mxu0 0
        %488 = vmatpush1.bf16.msra.mxu0 0
        %489 = vmatprep.subr.bf16.mxu0 0
        %490 = vmatpush1.bf16.msra.mxu0 0
        %491 = vmatprep.subr.bf16.mxu0 0
        %492 = vmatpush1.bf16.msra.mxu0 0
        %493 = vmatprep.subr.bf16.mxu0 0
        %494 = vmatpush1.bf16.msra.mxu0 0
        %495 = vmatprep.subr.bf16.mxu0 0
        %496 = vmatpush1.bf16.msra.mxu0 0
        %497 = vmatprep.subr.bf16.mxu0 0
        %498 = vmatpush1.bf16.msra.mxu0 0
        %499 = vmatprep.subr.bf16.mxu0 0
        %500 = vmatpush1.bf16.msra.mxu0 0
        %501 = vmatprep.mubr.bf16.mxu0 0
        %502 = vmatmul.mubr.bf16.gmra.mrb[0].mxu0 %v404
        %v503 = vpop.f32.mrb[0].mxu0
        %v504 = vadd.f32 %v286, %v503
        %v505 = vpop.f32.mrb[0].mxu0
        %v506 = vpop.f32.mrb[0].mxu0
        %v507 = vpop.f32.mrb[0].mxu0
        %508 = vdwg.mxu0
        %v509 = vmax.f32 %v504, 0.0
        %v510 = vpack.c.bf16 %v509, %v509
        %v512 = vrot.slane %v510, 4
        %514 = vst [vmem:[#allocation3] sm:$0xf0] %v512
        %v515 = vld [vmem:[#allocation2] sm:$0xf]
        %v516 = vld [vmem:[#allocation2] sm:$0x1f]
        %v517 = vld [vmem:[#allocation3] sm:$0xf8]
        %v518 = vld [vmem:[#allocation3] sm:$0xf0]
        %v519 = vld [vmem:[%s4] sm:$0xf]
        %v520 = vld [vmem:[%s4 + $0x4] sm:$0xf]
        %v521 = vld [vmem:[%s4 + $0x8] sm:$0xf]
        %v522 = vld [vmem:[%s4 + $0xc] sm:$0xf]
        %v523 = vld [vmem:[%s4 + $0x10] sm:$0xf]
        %v524 = vld [vmem:[%s4 + $0x14] sm:$0xf]
        %v525 = vld [vmem:[%s4 + $0x18] sm:$0xf]
        %v526 = vld [vmem:[%s4 + $0x1c] sm:$0xf]
        %v527 = vld [vmem:[%s4 + $0x20] sm:$0xf]
        %v528 = vld [vmem:[%s4 + $0x24] sm:$0xf]
        %v529 = vld [vmem:[%s4 + $0x28] sm:$0xf]
        %v530 = vld [vmem:[%s4 + $0x2c] sm:$0xf]
        %v531 = vld [vmem:[%s4 + $0x30] sm:$0xf]
        %v532 = vld [vmem:[%s4 + $0x34] sm:$0xf]
        %v533 = vld [vmem:[%s4 + $0x38] sm:$0xf]
        %v534 = vld [vmem:[%s4 + $0x3c] sm:$0xf]
        %s535 = scalar_lea.vmem %s4, 64
        %v536 = vld [vmem:[%s535] sm:$0xf]
        %v537 = vld [vmem:[%s535 + $0x4] sm:$0xf]
        %v538 = vld [vmem:[%s535 + $0x8] sm:$0xf]
        %v539 = vld [vmem:[%s535 + $0xc] sm:$0xf]
        %v540 = vld [vmem:[%s535 + $0x10] sm:$0xf]
        %v541 = vld [vmem:[%s535 + $0x14] sm:$0xf]
        %v542 = vld [vmem:[%s535 + $0x18] sm:$0xf]
        %v543 = vld [vmem:[%s535 + $0x1c] sm:$0xf]
        %v544 = vld [vmem:[%s535 + $0x20] sm:$0xf]
        %v545 = vld [vmem:[%s535 + $0x24] sm:$0xf]
        %v546 = vld [vmem:[%s535 + $0x28] sm:$0xf]
        %v547 = vld [vmem:[%s535 + $0x2c] sm:$0xf]
        %v548 = vld [vmem:[%s535 + $0x30] sm:$0xf]
        %v549 = vld [vmem:[%s535 + $0x34] sm:$0xf]
        %v550 = vld [vmem:[%s535 + $0x38] sm:$0xf]
        %v551 = vld [vmem:[%s535 + $0x3c] sm:$0xf]
        %v568 = vunpack.c.l.b16 %v536
        %v569 = vunpack.c.l.b16 %v537
        %v570 = vunpack.c.l.b16 %v538
        %v571 = vunpack.c.l.b16 %v539
        %v572 = vunpack.c.l.b16 %v540
        %v573 = vunpack.c.l.b16 %v541
        %v574 = vunpack.c.l.b16 %v542
        %v575 = vunpack.c.l.b16 %v543
        %v576 = vunpack.c.l.b16 %v544
        %v577 = vunpack.c.l.b16 %v545
        %v578 = vunpack.c.l.b16 %v546
        %v579 = vunpack.c.l.b16 %v547
        %v580 = vunpack.c.l.b16 %v548
        %v581 = vunpack.c.l.b16 %v549
        %v582 = vunpack.c.l.b16 %v550
        %v583 = vunpack.c.l.b16 %v551
        %v584 = vpack.c.b16 %v569, %v568
        %v585 = vpack.c.b16 %v571, %v570
        %v586 = vpack.c.b16 %v573, %v572
        %v587 = vpack.c.b16 %v575, %v574
        %v588 = vpack.c.b16 %v577, %v576
        %v589 = vpack.c.b16 %v579, %v578
        %v590 = vpack.c.b16 %v581, %v580
        %v591 = vpack.c.b16 %v583, %v582
        %600 = vmatprep.subr.bf16.mxu0 0
        %601 = vmatpush1.bf16.msra.mxu0 %v584
        %602 = vmatprep.subr.bf16.mxu0 0
        %603 = vmatpush1.bf16.msra.mxu0 %v585
        %604 = vmatprep.subr.bf16.mxu0 0
        %605 = vmatpush1.bf16.msra.mxu0 %v586
        %606 = vmatprep.subr.bf16.mxu0 0
        %607 = vmatpush1.bf16.msra.mxu0 %v587
        %608 = vmatprep.subr.bf16.mxu0 0
        %609 = vmatpush1.bf16.msra.mxu0 %v588
        %610 = vmatprep.subr.bf16.mxu0 0
        %611 = vmatpush1.bf16.msra.mxu0 %v589
        %612 = vmatprep.subr.bf16.mxu0 0
        %613 = vmatpush1.bf16.msra.mxu0 %v590
        %614 = vmatprep.subr.bf16.mxu0 0
        %615 = vmatpush1.bf16.msra.mxu0 %v591
        %616 = vmatprep.subr.bf16.mxu0 0
        %617 = vmatpush1.bf16.msra.mxu0 0
        %618 = vmatprep.subr.bf16.mxu0 0
        %619 = vmatpush1.bf16.msra.mxu0 0
        %620 = vmatprep.subr.bf16.mxu0 0
        %621 = vmatpush1.bf16.msra.mxu0 0
        %622 = vmatprep.subr.bf16.mxu0 0
        %623 = vmatpush1.bf16.msra.mxu0 0
        %624 = vmatprep.subr.bf16.mxu0 0
        %625 = vmatpush1.bf16.msra.mxu0 0
        %626 = vmatprep.subr.bf16.mxu0 0
        %627 = vmatpush1.bf16.msra.mxu0 0
        %628 = vmatprep.subr.bf16.mxu0 0
        %629 = vmatpush1.bf16.msra.mxu0 0
        %630 = vmatprep.subr.bf16.mxu0 0
        %631 = vmatpush1.bf16.msra.mxu0 0
        %632 = vmatprep.mubr.bf16.mxu0 0
        %633 = vmatmul.mubr.bf16.gmra.mrb[0].mxu0 %v515
        %v634 = vpop.f32.mrb[0].mxu0
        %v635 = vadd.f32 0.0, %v634
        %v636 = vpop.f32.mrb[0].mxu0
        %v637 = vpop.f32.mrb[0].mxu0
        %v638 = vpop.f32.mrb[0].mxu0
        %639 = vdwg.mxu0
        %v641 = vshrl.u32 %v517, 16
        %v643 = vrot.slane %v641, 3
        %v644 = vshll.u32 %v517, 16
        %v646 = vrot.slane %v644, 4
        %v647 = vor.u32 %v643, %v646
        %v665 = vunpack.c.l.b16 %v519
        %v666 = vunpack.c.l.b16 %v520
        %v667 = vunpack.c.l.b16 %v521
        %v668 = vunpack.c.l.b16 %v522
        %v669 = vunpack.c.l.b16 %v523
        %v670 = vunpack.c.l.b16 %v524
        %v671 = vunpack.c.l.b16 %v525
        %v672 = vunpack.c.l.b16 %v526
        %v673 = vunpack.c.l.b16 %v527
        %v674 = vunpack.c.l.b16 %v528
        %v675 = vunpack.c.l.b16 %v529
        %v676 = vunpack.c.l.b16 %v530
        %v677 = vunpack.c.l.b16 %v531
        %v678 = vunpack.c.l.b16 %v532
        %v679 = vunpack.c.l.b16 %v533
        %v680 = vunpack.c.l.b16 %v534
        %v681 = vpack.c.b16 %v666, %v665
        %v682 = vpack.c.b16 %v668, %v667
        %v683 = vpack.c.b16 %v670, %v669
        %v684 = vpack.c.b16 %v672, %v671
        %v685 = vpack.c.b16 %v674, %v673
        %v686 = vpack.c.b16 %v676, %v675
        %v687 = vpack.c.b16 %v678, %v677
        %v688 = vpack.c.b16 %v680, %v679
        %697 = vmatprep.subr.bf16.mxu0 0
        %698 = vmatpush1.bf16.msra.mxu0 %v681
        %699 = vmatprep.subr.bf16.mxu0 0
        %700 = vmatpush1.bf16.msra.mxu0 %v682
        %701 = vmatprep.subr.bf16.mxu0 0
        %702 = vmatpush1.bf16.msra.mxu0 %v683
        %703 = vmatprep.subr.bf16.mxu0 0
        %704 = vmatpush1.bf16.msra.mxu0 %v684
        %705 = vmatprep.subr.bf16.mxu0 0
        %706 = vmatpush1.bf16.msra.mxu0 %v685
        %707 = vmatprep.subr.bf16.mxu0 0
        %708 = vmatpush1.bf16.msra.mxu0 %v686
        %709 = vmatprep.subr.bf16.mxu0 0
        %710 = vmatpush1.bf16.msra.mxu0 %v687
        %711 = vmatprep.subr.bf16.mxu0 0
        %712 = vmatpush1.bf16.msra.mxu0 %v688
        %713 = vmatprep.subr.bf16.mxu0 0
        %714 = vmatpush1.bf16.msra.mxu0 0
        %715 = vmatprep.subr.bf16.mxu0 0
        %716 = vmatpush1.bf16.msra.mxu0 0
        %717 = vmatprep.subr.bf16.mxu0 0
        %718 = vmatpush1.bf16.msra.mxu0 0
        %719 = vmatprep.subr.bf16.mxu0 0
        %720 = vmatpush1.bf16.msra.mxu0 0
        %721 = vmatprep.subr.bf16.mxu0 0
        %722 = vmatpush1.bf16.msra.mxu0 0
        %723 = vmatprep.subr.bf16.mxu0 0
        %724 = vmatpush1.bf16.msra.mxu0 0
        %725 = vmatprep.subr.bf16.mxu0 0
        %726 = vmatpush1.bf16.msra.mxu0 0
        %727 = vmatprep.subr.bf16.mxu0 0
        %728 = vmatpush1.bf16.msra.mxu0 0
        %729 = vmatprep.mubr.bf16.mxu0 0
        %730 = vmatmul.mubr.bf16.gmra.mrb[0].mxu0 %v647
        %v731 = vpop.f32.mrb[0].mxu0
        %v732 = vadd.f32 %v635, %v731
        %v733 = vpop.f32.mrb[0].mxu0
        %v734 = vpop.f32.mrb[0].mxu0
        %v735 = vpop.f32.mrb[0].mxu0
        %736 = vdwg.mxu0
        %s737 = scalar_lea.vmem %s4, 128
        %v738 = vld [vmem:[%s737] sm:$0xf]
        %v739 = vld [vmem:[%s737 + $0x4] sm:$0xf]
        %v740 = vld [vmem:[%s737 + $0x8] sm:$0xf]
        %v741 = vld [vmem:[%s737 + $0xc] sm:$0xf]
        %v742 = vld [vmem:[%s737 + $0x10] sm:$0xf]
        %v743 = vld [vmem:[%s737 + $0x14] sm:$0xf]
        %v744 = vld [vmem:[%s737 + $0x18] sm:$0xf]
        %v745 = vld [vmem:[%s737 + $0x1c] sm:$0xf]
        %v746 = vld [vmem:[%s737 + $0x20] sm:$0xf]
        %v747 = vld [vmem:[%s737 + $0x24] sm:$0xf]
        %v748 = vld [vmem:[%s737 + $0x28] sm:$0xf]
        %v749 = vld [vmem:[%s737 + $0x2c] sm:$0xf]
        %v750 = vld [vmem:[%s737 + $0x30] sm:$0xf]
        %v751 = vld [vmem:[%s737 + $0x34] sm:$0xf]
        %v752 = vld [vmem:[%s737 + $0x38] sm:$0xf]
        %v753 = vld [vmem:[%s737 + $0x3c] sm:$0xf]
        %v755 = vrot.slane %v518, 4
        %v773 = vunpack.c.l.b16 %v738
        %v774 = vunpack.c.l.b16 %v739
        %v775 = vunpack.c.l.b16 %v740
        %v776 = vunpack.c.l.b16 %v741
        %v777 = vunpack.c.l.b16 %v742
        %v778 = vunpack.c.l.b16 %v743
        %v779 = vunpack.c.l.b16 %v744
        %v780 = vunpack.c.l.b16 %v745
        %v781 = vunpack.c.l.b16 %v746
        %v782 = vunpack.c.l.b16 %v747
        %v783 = vunpack.c.l.b16 %v748
        %v784 = vunpack.c.l.b16 %v749
        %v785 = vunpack.c.l.b16 %v750
        %v786 = vunpack.c.l.b16 %v751
        %v787 = vunpack.c.l.b16 %v752
        %v788 = vunpack.c.l.b16 %v753
        %v789 = vpack.c.b16 %v774, %v773
        %v790 = vpack.c.b16 %v776, %v775
        %v791 = vpack.c.b16 %v778, %v777
        %v792 = vpack.c.b16 %v780, %v779
        %v793 = vpack.c.b16 %v782, %v781
        %v794 = vpack.c.b16 %v784, %v783
        %v795 = vpack.c.b16 %v786, %v785
        %v796 = vpack.c.b16 %v788, %v787
        %805 = vmatprep.subr.bf16.mxu0 0
        %806 = vmatpush1.bf16.msra.mxu0 %v789
        %807 = vmatprep.subr.bf16.mxu0 0
        %808 = vmatpush1.bf16.msra.mxu0 %v790
        %809 = vmatprep.subr.bf16.mxu0 0
        %810 = vmatpush1.bf16.msra.mxu0 %v791
        %811 = vmatprep.subr.bf16.mxu0 0
        %812 = vmatpush1.bf16.msra.mxu0 %v792
        %813 = vmatprep.subr.bf16.mxu0 0
        %814 = vmatpush1.bf16.msra.mxu0 %v793
        %815 = vmatprep.subr.bf16.mxu0 0
        %816 = vmatpush1.bf16.msra.mxu0 %v794
        %817 = vmatprep.subr.bf16.mxu0 0
        %818 = vmatpush1.bf16.msra.mxu0 %v795
        %819 = vmatprep.subr.bf16.mxu0 0
        %820 = vmatpush1.bf16.msra.mxu0 %v796
        %821 = vmatprep.subr.bf16.mxu0 0
        %822 = vmatpush1.bf16.msra.mxu0 0
        %823 = vmatprep.subr.bf16.mxu0 0
        %824 = vmatpush1.bf16.msra.mxu0 0
        %825 = vmatprep.subr.bf16.mxu0 0
        %826 = vmatpush1.bf16.msra.mxu0 0
        %827 = vmatprep.subr.bf16.mxu0 0
        %828 = vmatpush1.bf16.msra.mxu0 0
        %829 = vmatprep.subr.bf16.mxu0 0
        %830 = vmatpush1.bf16.msra.mxu0 0
        %831 = vmatprep.subr.bf16.mxu0 0
        %832 = vmatpush1.bf16.msra.mxu0 0
        %833 = vmatprep.subr.bf16.mxu0 0
        %834 = vmatpush1.bf16.msra.mxu0 0
        %835 = vmatprep.subr.bf16.mxu0 0
        %836 = vmatpush1.bf16.msra.mxu0 0
        %837 = vmatprep.mubr.bf16.mxu0 0
        %838 = vmatmul.mubr.bf16.gmra.mrb[0].mxu0 %v755
        %v839 = vpop.f32.mrb[0].mxu0
        %v840 = vadd.f32 0.0, %v839
        %v841 = vpop.f32.mrb[0].mxu0
        %v842 = vpop.f32.mrb[0].mxu0
        %v843 = vpop.f32.mrb[0].mxu0
        %844 = vdwg.mxu0
        %v845 = vadd.f32 %v732, %v840
        %846 = vmatprep.subr.bf16.mxu0 0
        %847 = vmatpush1.bf16.msra.mxu0 %v584
        %848 = vmatprep.subr.bf16.mxu0 0
        %849 = vmatpush1.bf16.msra.mxu0 %v585
        %850 = vmatprep.subr.bf16.mxu0 0
        %851 = vmatpush1.bf16.msra.mxu0 %v586
        %852 = vmatprep.subr.bf16.mxu0 0
        %853 = vmatpush1.bf16.msra.mxu0 %v587
        %854 = vmatprep.subr.bf16.mxu0 0
        %855 = vmatpush1.bf16.msra.mxu0 %v588
        %856 = vmatprep.subr.bf16.mxu0 0
        %857 = vmatpush1.bf16.msra.mxu0 %v589
        %858 = vmatprep.subr.bf16.mxu0 0
        %859 = vmatpush1.bf16.msra.mxu0 %v590
        %860 = vmatprep.subr.bf16.mxu0 0
        %861 = vmatpush1.bf16.msra.mxu0 %v591
        %862 = vmatprep.subr.bf16.mxu0 0
        %863 = vmatpush1.bf16.msra.mxu0 0
        %864 = vmatprep.subr.bf16.mxu0 0
        %865 = vmatpush1.bf16.msra.mxu0 0
        %866 = vmatprep.subr.bf16.mxu0 0
        %867 = vmatpush1.bf16.msra.mxu0 0
        %868 = vmatprep.subr.bf16.mxu0 0
        %869 = vmatpush1.bf16.msra.mxu0 0
        %870 = vmatprep.subr.bf16.mxu0 0
        %871 = vmatpush1.bf16.msra.mxu0 0
        %872 = vmatprep.subr.bf16.mxu0 0
        %873 = vmatpush1.bf16.msra.mxu0 0
        %874 = vmatprep.subr.bf16.mxu0 0
        %875 = vmatpush1.bf16.msra.mxu0 0
        %876 = vmatprep.subr.bf16.mxu0 0
        %877 = vmatpush1.bf16.msra.mxu0 0
        %878 = vmatprep.mubr.bf16.mxu0 0
        %879 = vmatmul.mubr.bf16.gmra.mrb[0].mxu0 %v755
        %v880 = vpop.f32.mrb[0].mxu0
        %v881 = vadd.f32 0.0, %v880
        %v882 = vpop.f32.mrb[0].mxu0
        %v883 = vpop.f32.mrb[0].mxu0
        %v884 = vpop.f32.mrb[0].mxu0
        %885 = vdwg.mxu0
        %886 = vmatprep.subr.bf16.mxu0 0
        %887 = vmatpush1.bf16.msra.mxu0 %v681
        %888 = vmatprep.subr.bf16.mxu0 0
        %889 = vmatpush1.bf16.msra.mxu0 %v682
        %890 = vmatprep.subr.bf16.mxu0 0
        %891 = vmatpush1.bf16.msra.mxu0 %v683
        %892 = vmatprep.subr.bf16.mxu0 0
        %893 = vmatpush1.bf16.msra.mxu0 %v684
        %894 = vmatprep.subr.bf16.mxu0 0
        %895 = vmatpush1.bf16.msra.mxu0 %v685
        %896 = vmatprep.subr.bf16.mxu0 0
        %897 = vmatpush1.bf16.msra.mxu0 %v686
        %898 = vmatprep.subr.bf16.mxu0 0
        %899 = vmatpush1.bf16.msra.mxu0 %v687
        %900 = vmatprep.subr.bf16.mxu0 0
        %901 = vmatpush1.bf16.msra.mxu0 %v688
        %902 = vmatprep.subr.bf16.mxu0 0
        %903 = vmatpush1.bf16.msra.mxu0 0
        %904 = vmatprep.subr.bf16.mxu0 0
        %905 = vmatpush1.bf16.msra.mxu0 0
        %906 = vmatprep.subr.bf16.mxu0 0
        %907 = vmatpush1.bf16.msra.mxu0 0
        %908 = vmatprep.subr.bf16.mxu0 0
        %909 = vmatpush1.bf16.msra.mxu0 0
        %910 = vmatprep.subr.bf16.mxu0 0
        %911 = vmatpush1.bf16.msra.mxu0 0
        %912 = vmatprep.subr.bf16.mxu0 0
        %913 = vmatpush1.bf16.msra.mxu0 0
        %914 = vmatprep.subr.bf16.mxu0 0
        %915 = vmatpush1.bf16.msra.mxu0 0
        %916 = vmatprep.subr.bf16.mxu0 0
        %917 = vmatpush1.bf16.msra.mxu0 0
        %918 = vmatprep.mubr.bf16.mxu0 0
        %919 = vmatmul.mubr.bf16.gmra.mrb[0].mxu0 %v515
        %v920 = vpop.f32.mrb[0].mxu0
        %v921 = vadd.f32 %v881, %v920
        %v922 = vpop.f32.mrb[0].mxu0
        %v923 = vpop.f32.mrb[0].mxu0
        %v924 = vpop.f32.mrb[0].mxu0
        %925 = vdwg.mxu0
        %v927 = vshrl.u32 %v516, 16
        %v929 = vshll.u32 %v516, 16
        %v931 = vrot.slane %v929, 1
        %v932 = vor.u32 %v927, %v931
        %934 = vmatprep.subr.bf16.mxu0 0
        %935 = vmatpush1.bf16.msra.mxu0 %v789
        %936 = vmatprep.subr.bf16.mxu0 0
        %937 = vmatpush1.bf16.msra.mxu0 %v790
        %938 = vmatprep.subr.bf16.mxu0 0
        %939 = vmatpush1.bf16.msra.mxu0 %v791
        %940 = vmatprep.subr.bf16.mxu0 0
        %941 = vmatpush1.bf16.msra.mxu0 %v792
        %942 = vmatprep.subr.bf16.mxu0 0
        %943 = vmatpush1.bf16.msra.mxu0 %v793
        %944 = vmatprep.subr.bf16.mxu0 0
        %945 = vmatpush1.bf16.msra.mxu0 %v794
        %946 = vmatprep.subr.bf16.mxu0 0
        %947 = vmatpush1.bf16.msra.mxu0 %v795
        %948 = vmatprep.subr.bf16.mxu0 0
        %949 = vmatpush1.bf16.msra.mxu0 %v796
        %950 = vmatprep.subr.bf16.mxu0 0
        %951 = vmatpush1.bf16.msra.mxu0 0
        %952 = vmatprep.subr.bf16.mxu0 0
        %953 = vmatpush1.bf16.msra.mxu0 0
        %954 = vmatprep.subr.bf16.mxu0 0
        %955 = vmatpush1.bf16.msra.mxu0 0
        %956 = vmatprep.subr.bf16.mxu0 0
        %957 = vmatpush1.bf16.msra.mxu0 0
        %958 = vmatprep.subr.bf16.mxu0 0
        %959 = vmatpush1.bf16.msra.mxu0 0
        %960 = vmatprep.subr.bf16.mxu0 0
        %961 = vmatpush1.bf16.msra.mxu0 0
        %962 = vmatprep.subr.bf16.mxu0 0
        %963 = vmatpush1.bf16.msra.mxu0 0
        %964 = vmatprep.subr.bf16.mxu0 0
        %965 = vmatpush1.bf16.msra.mxu0 0
        %966 = vmatprep.mubr.bf16.mxu0 0
        %967 = vmatmul.mubr.bf16.gmra.mrb[0].mxu0 %v932
        %v968 = vpop.f32.mrb[0].mxu0
        %v969 = vadd.f32 0.0, %v968
        %v970 = vpop.f32.mrb[0].mxu0
        %v971 = vpop.f32.mrb[0].mxu0
        %v972 = vpop.f32.mrb[0].mxu0
        %973 = vdwg.mxu0
        %v974 = vadd.f32 %v921, %v969
        %v975 = vadd.f32 %v845, %v292
        %v976 = vmax.f32 %v975, 0.0
        %v977 = vadd.f32 %v974, %v292
        %v978 = vmax.f32 %v977, 0.0
        %v979 = vmax.f32 %v976, %v978
        %v980 = vpack.c.bf16 %v979, %v979
        %981 = vst [vmem:[%s278] sm:$0xf] %v980
        %p982 = scmp.lt.s32.totalorder %s18, 1
        %s983 = scalar_select %p982, %s18, 1
        %s984 = smul.addr %s983, 4
        %s985 = scalar_lea.vmem %s6, %s984
        // Predicated region
        $region49: #{_lambda_.1} parent=43 // pred_check
          %p986 = pneg %p172
        $region50: #{_lambda_.1} parent=43 // pred_check_branch
          %988 = sbr.rel (%p986) target = $region52
        $region51: #{_lambda_.1} parent=43 // pred_region
          _
        $region52: #{_lambda_.1} parent=43 // pred_fallthru
          _
      $region44: #{_lambda_.1} parent=5 // pred_fallthru
        _
      %p989 = scmp.le.s32.totalorder 2, %s13
      // Predicated region
      $region53: #{_lambda_.1} parent=5 // pred_check
        %p990 = pneg %p989
      $region54: #{_lambda_.1} parent=5 // pred_check_branch
        %992 = sbr.rel (%p990) target = $region56
      $region55: #{_lambda_.1} parent=5 // pred_region
        %s993 = ssub.s32 %s13, 2
        // Predicated region
        $region57: #{_lambda_.1} parent=55 // pred_check
          %p994 = pneg %p178
        $region58: #{_lambda_.1} parent=55 // pred_check_branch
          %996 = sbr.rel (%p994) target = $region60
        $region59: #{_lambda_.1} parent=55 // pred_region
          %p997 = scmp.lt.s32.totalorder %s19, 1
          %s998 = scalar_select %p997, %s19, 1
          %s999 = smul.addr %s998, 4
          %s1000 = scalar_lea.vmem %s6, %s999
        $region60: #{_lambda_.1} parent=55 // pred_fallthru
          _
      $region56: #{_lambda_.1} parent=5 // pred_fallthru
        _
    $region6: #{_lambda_.1} parent=1 // loop_footer
      %s17 = sadd.s32 1, %s13
    $region7: #{_lambda_.1} parent=1 // loop_footer_branch
      %12 = sbr.rel target = $region3
    $region8: #{_lambda_.1} parent=1 // loop_exit
      _
    %1001 = vsyncpa [#allocation5], 1
    %s1002 = scalar_lea.sflag [#allocation5], 1
    %1003 = vsyncpa %s1002, 1

</llo_original>
